<compile_context>
chip_gen: v5e
topology: v5e:2x2
jax: 0.10.0
libtpu: 0.0.40
codegen_flags: <defaults>
</compile_context>

<pallas_src>
import functools

import jax
import jax.numpy as jnp
from jax import lax
from jax.experimental import pallas as pl
from jax.experimental.pallas import tpu as pltpu


# ----------------------------- fused Pallas kernel --------------------------

def _conv_block_kernel(n, l, patches_ref, wconv_ref, gamma_ref, beta_ref,
                       wqk_ref, uqk_ref, wv_ref, bv_ref, gattn_ref, o_ref):
    """conv(4x4,s2,p1) -> cond-BN -> relu -> self-attention, fully in VMEM.

    Everything is carried lane-dense as (Cout, M), M = N*Ho*Wo (batch-major),
    so every VPU stage uses full 128-lane vregs and the output store is a
    single unmasked vst.
    """
    # --- spectral-norm Conv2d as ONE (Cout, KKCin) @ (KKCin, M) matmul -------
    y = jnp.dot(wconv_ref[...], patches_ref[...],
                preferred_element_type=jnp.float32)                # (Cout, M) f32

    # --- BatchNorm2d(affine=False): training-mode batch stats, eps=1e-5 -----
    # TODO(synk): running_mean/running_var tracking (eval-mode parity) is not
    # carried; training-mode batch statistics only.
    mean = jnp.mean(y, axis=1, keepdims=True)                      # (Cout, 1)
    var = jnp.mean((y - mean) ** 2, axis=1, keepdims=True)
    y_hat = (y - mean) * lax.rsqrt(var + 1e-5)

    # conditional affine (gamma = softplus(cond@Wg), beta = cond@Wb computed
    # and lane-broadcast in the wrapper) followed by relu
    x = jnp.maximum(gamma_ref[...] * y_hat + beta_ref[...], 0.0)   # (Cout, M) f32

    # --- SelfAttention with folded Wq^T Wk -----------------------------------
    # query_key[n,i,j] = x_i.(Wq^T Wk).x_j + x_i.(Wq^T b_k) + f(n,j); the
    # j-only / b_q terms cancel under torch's softmax over dim=1 (query idx i).
    x_bf = x.astype(jnp.bfloat16)
    y1 = (jnp.dot(wqk_ref[...], x_bf, preferred_element_type=jnp.float32)
          + uqk_ref[...]).astype(jnp.bfloat16)                     # (Cout, M)
    v = (jnp.dot(wv_ref[...], x_bf, preferred_element_type=jnp.float32)
         + bv_ref[...]).astype(jnp.bfloat16)                       # (Cout, M)

    # per-batch logits / softmax / weighted sum (N is tiny & static -> unroll)
    outs = []
    for b in range(n):
        xs = x_bf[:, b * l:(b + 1) * l]                            # (Cout, L)
        y1s = y1[:, b * l:(b + 1) * l]
        vs = v[:, b * l:(b + 1) * l]
        # qk_t[j, i] = sum_c y1s[c, j] * xs[c, i]; softmax over i (lane axis)
        qk_t = lax.dot_general(y1s, xs, (((0,), (0,)), ((), ())),
                               preferred_element_type=jnp.float32)  # (L, L)
        mx = jnp.max(qk_t, axis=-1, keepdims=True)
        e = jnp.exp(qk_t - mx)
        attn_t = e * pl.reciprocal(jnp.sum(e, axis=-1, keepdims=True),
                                   approx=True)
        # attn_out[c, j] = sum_i vs[c, i] * attn_t[j, i]
        outs.append(lax.dot_general(vs, attn_t.astype(jnp.bfloat16),
                                    (((1,), (1,)), ((), ())),
                                    preferred_element_type=jnp.float32))
    attn_out = jnp.concatenate(outs, axis=1)                       # (Cout, M)

    # residual + single lane-dense (unmasked) store
    o_ref[...] = gattn_ref[0] * attn_out + x


# ----------------------------- JAX wrapper ----------------------------------

def spectral_normalize(w, u):
    """One power-iteration step with the stored u, then w / sigma."""
    # TODO(synk): the persistent in-place update of the `u` buffer across calls
    # (PyTorch forward-pre-hook state) is not carried; single forward only.
    w_mat = w.reshape(w.shape[0], -1)
    v = w_mat.T @ u
    v = v / jnp.linalg.norm(v)
    u2 = w_mat @ v
    u2 = u2 / jnp.linalg.norm(u2)
    sigma = u2 @ w_mat @ v
    return w / sigma


def _im2col_t(x_nchw, K, stride, pad):
    """NCHW -> (K*K*Cin, N*Ho*Wo) im2col, feature order (kh, kw, cin)."""
    N, C, H, W = x_nchw.shape
    Ho = (H + 2 * pad - K) // stride + 1
    Wo = (W + 2 * pad - K) // stride + 1
    x = jnp.transpose(x_nchw, (0, 2, 3, 1))                        # NHWC
    xp = jnp.pad(x, ((0, 0), (pad, pad), (pad, pad), (0, 0)))
    cols = []
    for kh in range(K):
        for kw in range(K):
            cols.append(xp[:, kh:kh + stride * (Ho - 1) + 1:stride,
                           kw:kw + stride * (Wo - 1) + 1:stride, :])
    patches = jnp.concatenate(cols, axis=-1)                       # (N,Ho,Wo,KKC)
    return patches.reshape(N * Ho * Wo, K * K * C).T               # (KKC, M)


def conv_block_forward(params, x_nchw, cond):
    K, stride, pad = 4, 2, 1
    N, Cin, H, W = x_nchw.shape
    Cout = params['w_conv'].shape[0]
    Ho = (H + 2 * pad - K) // stride + 1
    Wo = (W + 2 * pad - K) // stride + 1
    L = Ho * Wo
    M = N * L

    # spectral-normalized weights (tiny; prepared on the XLA side)
    w_conv = spectral_normalize(params['w_conv'], params['u_conv'])
    wg = spectral_normalize(params['w_g'], params['u_g']).T        # (n_class, Cout)
    wb = spectral_normalize(params['w_b'], params['u_b']).T
    wq = spectral_normalize(params['w_q'], params['u_q'])          # (C/8, Cout)
    wk = spectral_normalize(params['w_k'], params['u_k'])
    wv = spectral_normalize(params['w_v'], params['u_v'])          # (Cout, Cout)

    # Fold Q/K: logits_i_term = x_i.(Wq^T Wk).x_j + x_i.(Wq^T b_k); the b_q /
    # j-only terms cancel under torch's softmax over dim=1 (the query index).
    wqk = wq.T @ wk                                                # (Cout, Cout)
    uqk = (params['b_k'] @ wq).T                                   # (Cout, 1)
    bv = params['b_v'].T                                           # (Cout, 1)

    # ConditionalNorm affine: tiny (N,n_class)@(n_class,Cout) matmuls +
    # softplus stay in the wrapper graph; pre-broadcast lane-dense (Cout, M).
    gamma_nc = jax.nn.softplus(cond @ wg)                          # (N, Cout)
    beta_nc = cond @ wb
    gamma_cm = jnp.broadcast_to(gamma_nc.T[:, :, None],
                                (Cout, N, L)).reshape(Cout, M)
    beta_cm = jnp.broadcast_to(beta_nc.T[:, :, None],
                               (Cout, N, L)).reshape(Cout, M)

    # wrapper-side im2col (fuses with the pad/transpose glue); bf16 MXU feeds
    patches = _im2col_t(x_nchw, K, stride, pad).astype(jnp.bfloat16)   # (KKCin, M)
    w_cm = jnp.transpose(w_conv, (0, 2, 3, 1)).reshape(
        Cout, K * K * Cin).astype(jnp.bfloat16)                        # (Cout, KKCin)

    vmem = pl.BlockSpec(memory_space=pltpu.MemorySpace.VMEM)
    smem = pl.BlockSpec(memory_space=pltpu.MemorySpace.SMEM)
    out_cm = pl.pallas_call(
        functools.partial(_conv_block_kernel, N, L),
        out_shape=jax.ShapeDtypeStruct((Cout, M), jnp.float32),
        in_specs=[vmem] * 8 + [smem],
        out_specs=vmem,
    )(patches, w_cm, gamma_cm, beta_cm,
      wqk.astype(jnp.bfloat16), uqk, wv.astype(jnp.bfloat16), bv,
      params['gamma_attn'])

    # lane-dense (Cout, N*L) -> NCHW
    return out_cm.reshape(Cout, N, Ho, Wo).transpose(1, 0, 2, 3)


# ----------------------------- main ------------------------------------------

if __name__ == "__main__":
    N, Cin, H, W = 2, 4, 16, 16
    Cout, n_class, K = 16, 8, 4
    C8 = Cout // 8

    key = jax.random.PRNGKey(0)
    ks = jax.random.split(key, 16)

    def xavier(k, shape, fan_in, fan_out):
        a = (6.0 / (fan_in + fan_out)) ** 0.5
        return jax.random.uniform(k, shape, jnp.float32, -a, a)

    params = dict(
        w_conv=xavier(ks[0], (Cout, Cin, K, K), Cin * K * K, Cout * K * K),
        u_conv=jax.random.normal(ks[1], (Cout,), jnp.float32),
        w_g=xavier(ks[2], (Cout, n_class), n_class, Cout),
        u_g=jax.random.normal(ks[3], (Cout,), jnp.float32),
        w_b=xavier(ks[4], (Cout, n_class), n_class, Cout),
        u_b=jax.random.normal(ks[5], (Cout,), jnp.float32),
        w_q=xavier(ks[6], (C8, Cout), Cout, C8),
        u_q=jax.random.normal(ks[7], (C8,), jnp.float32),
        b_q=jnp.zeros((1, C8), jnp.float32),   # cancels under softmax(dim=1); kept for parity
        w_k=xavier(ks[8], (C8, Cout), Cout, C8),
        u_k=jax.random.normal(ks[9], (C8,), jnp.float32),
        b_k=jnp.zeros((1, C8), jnp.float32),
        w_v=xavier(ks[10], (Cout, Cout), Cout, Cout),
        u_v=jax.random.normal(ks[11], (Cout,), jnp.float32),
        b_v=jnp.zeros((1, Cout), jnp.float32),
        gamma_attn=jnp.zeros((1,), jnp.float32),   # nn.Parameter(torch.tensor(0.0))
    )

    x = jax.random.normal(ks[12], (N, Cin, H, W), jnp.float32)     # NCHW
    cond = jax.random.normal(ks[13], (N, n_class), jnp.float32)

    fwd = jax.jit(conv_block_forward)
    out = jax.block_until_ready(fwd(params, x, cond))
    assert out.shape == (N, Cout, H // 2, W // 2)
    assert bool(jnp.isfinite(out).all())
    print("KERNEL_OK")
</pallas_src>

<mosaic_0001>
module attributes {stable_mosaic.version = 11 : i64} {
  func.func @_conv_block_kernel(%arg0: memref<64x128xbf16, #tpu.memory_space<vmem>>, %arg1: memref<16x64xbf16, #tpu.memory_space<vmem>>, %arg2: memref<16x128xf32, #tpu.memory_space<vmem>>, %arg3: memref<16x128xf32, #tpu.memory_space<vmem>>, %arg4: memref<16x16xbf16, #tpu.memory_space<vmem>>, %arg5: memref<16x1xf32, #tpu.memory_space<vmem>>, %arg6: memref<16x16xbf16, #tpu.memory_space<vmem>>, %arg7: memref<16x1xf32, #tpu.memory_space<vmem>>, %arg8: memref<1xf32, #tpu.memory_space<smem>>, %arg9: memref<16x128xf32, #tpu.memory_space<vmem>>) attributes {dimension_semantics = [], scalar_prefetch = 0 : i64, scratch_operands = 0 : i64, tpu.core_type = #tpu.core_type<tc>} {
    %c0 = arith.constant 0 : index
    %c0_0 = arith.constant 0 : index
    %0 = vector.load %arg1[%c0, %c0_0] : memref<16x64xbf16, #tpu.memory_space<vmem>>, vector<16x64xbf16>
    %c0_1 = arith.constant 0 : index
    %c0_2 = arith.constant 0 : index
    %1 = vector.load %arg0[%c0_1, %c0_2] : memref<64x128xbf16, #tpu.memory_space<vmem>>, vector<64x128xbf16>
    %cst = arith.constant dense<0.000000e+00> : vector<16x128xf32>
    %2 = tpu.matmul %0, %1, %cst {dimension_numbers = #tpu.dot_dimension_numbers<[1], [0], [0], [1], [0, 0, 1, 1], [], []>} : vector<16x64xbf16>, vector<64x128xbf16>, vector<16x128xf32> -> vector<16x128xf32>
    %cst_3 = arith.constant dense<0.000000e+00> : vector<16xf32>
    %3 = vector.multi_reduction <add>, %2, %cst_3 [1] : vector<16x128xf32> to vector<16xf32>
    %4 = vector.shape_cast %3 : vector<16xf32> to vector<16x1xf32>
    %cst_4 = arith.constant 1.280000e+02 : f32
    %5 = vector.broadcast %cst_4 : f32 to vector<16x1xf32>
    %6 = arith.divf %4, %5 : vector<16x1xf32>
    %7 = vector.broadcast %6 : vector<16x1xf32> to vector<16x128xf32>
    %8 = arith.subf %2, %7 : vector<16x128xf32>
    %9 = arith.mulf %8, %8 : vector<16x128xf32>
    %cst_5 = arith.constant dense<0.000000e+00> : vector<16xf32>
    %10 = vector.multi_reduction <add>, %9, %cst_5 [1] : vector<16x128xf32> to vector<16xf32>
    %11 = vector.shape_cast %10 : vector<16xf32> to vector<16x1xf32>
    %cst_6 = arith.constant 1.280000e+02 : f32
    %12 = vector.broadcast %cst_6 : f32 to vector<16x1xf32>
    %13 = arith.divf %11, %12 : vector<16x1xf32>
    %14 = vector.broadcast %6 : vector<16x1xf32> to vector<16x128xf32>
    %15 = arith.subf %2, %14 : vector<16x128xf32>
    %cst_7 = arith.constant 9.99999974E-6 : f32
    %16 = vector.broadcast %cst_7 : f32 to vector<16x1xf32>
    %17 = arith.addf %13, %16 : vector<16x1xf32>
    %18 = math.rsqrt %17 : vector<16x1xf32>
    %19 = vector.broadcast %18 : vector<16x1xf32> to vector<16x128xf32>
    %20 = arith.mulf %15, %19 : vector<16x128xf32>
    %c0_8 = arith.constant 0 : index
    %c0_9 = arith.constant 0 : index
    %21 = vector.load %arg2[%c0_8, %c0_9] : memref<16x128xf32, #tpu.memory_space<vmem>>, vector<16x128xf32>
    %22 = arith.mulf %21, %20 : vector<16x128xf32>
    %c0_10 = arith.constant 0 : index
    %c0_11 = arith.constant 0 : index
    %23 = vector.load %arg3[%c0_10, %c0_11] : memref<16x128xf32, #tpu.memory_space<vmem>>, vector<16x128xf32>
    %24 = arith.addf %22, %23 : vector<16x128xf32>
    %cst_12 = arith.constant 0.000000e+00 : f32
    %25 = vector.broadcast %cst_12 : f32 to vector<16x128xf32>
    %26 = arith.maximumf %24, %25 : vector<16x128xf32>
    %27 = arith.truncf %26 : vector<16x128xf32> to vector<16x128xbf16>
    %c0_13 = arith.constant 0 : index
    %c0_14 = arith.constant 0 : index
    %28 = vector.load %arg4[%c0_13, %c0_14] : memref<16x16xbf16, #tpu.memory_space<vmem>>, vector<16x16xbf16>
    %cst_15 = arith.constant dense<0.000000e+00> : vector<16x128xf32>
    %29 = tpu.matmul %28, %27, %cst_15 {dimension_numbers = #tpu.dot_dimension_numbers<[1], [0], [0], [1], [0, 0, 1, 1], [], []>} : vector<16x16xbf16>, vector<16x128xbf16>, vector<16x128xf32> -> vector<16x128xf32>
    %c0_16 = arith.constant 0 : index
    %c0_17 = arith.constant 0 : index
    %30 = vector.load %arg5[%c0_16, %c0_17] : memref<16x1xf32, #tpu.memory_space<vmem>>, vector<16x1xf32>
    %31 = vector.broadcast %30 : vector<16x1xf32> to vector<16x128xf32>
    %32 = arith.addf %29, %31 : vector<16x128xf32>
    %33 = arith.truncf %32 : vector<16x128xf32> to vector<16x128xbf16>
    %c0_18 = arith.constant 0 : index
    %c0_19 = arith.constant 0 : index
    %34 = vector.load %arg6[%c0_18, %c0_19] : memref<16x16xbf16, #tpu.memory_space<vmem>>, vector<16x16xbf16>
    %cst_20 = arith.constant dense<0.000000e+00> : vector<16x128xf32>
    %35 = tpu.matmul %34, %27, %cst_20 {dimension_numbers = #tpu.dot_dimension_numbers<[1], [0], [0], [1], [0, 0, 1, 1], [], []>} : vector<16x16xbf16>, vector<16x128xbf16>, vector<16x128xf32> -> vector<16x128xf32>
    %c0_21 = arith.constant 0 : index
    %c0_22 = arith.constant 0 : index
    %36 = vector.load %arg7[%c0_21, %c0_22] : memref<16x1xf32, #tpu.memory_space<vmem>>, vector<16x1xf32>
    %37 = vector.broadcast %36 : vector<16x1xf32> to vector<16x128xf32>
    %38 = arith.addf %35, %37 : vector<16x128xf32>
    %39 = arith.truncf %38 : vector<16x128xf32> to vector<16x128xbf16>
    %40 = vector.extract_strided_slice %27 {offsets = [0, 0], sizes = [16, 64], strides = [1, 1]} : vector<16x128xbf16> to vector<16x64xbf16>
    %41 = vector.extract_strided_slice %33 {offsets = [0, 0], sizes = [16, 64], strides = [1, 1]} : vector<16x128xbf16> to vector<16x64xbf16>
    %42 = vector.extract_strided_slice %39 {offsets = [0, 0], sizes = [16, 64], strides = [1, 1]} : vector<16x128xbf16> to vector<16x64xbf16>
    %cst_23 = arith.constant dense<0.000000e+00> : vector<64x64xf32>
    %43 = tpu.matmul %41, %40, %cst_23 {dimension_numbers = #tpu.dot_dimension_numbers<[0], [0], [1], [1], [0, 1, 1, 1], [], []>} : vector<16x64xbf16>, vector<16x64xbf16>, vector<64x64xf32> -> vector<64x64xf32>
    %cst_24 = arith.constant dense<0xFF800000> : vector<64xf32>
    %44 = vector.multi_reduction <maximumf>, %43, %cst_24 [1] : vector<64x64xf32> to vector<64xf32>
    %45 = vector.shape_cast %44 : vector<64xf32> to vector<64x1xf32>
    %46 = vector.broadcast %45 : vector<64x1xf32> to vector<64x64xf32>
    %47 = arith.subf %43, %46 : vector<64x64xf32>
    %48 = math.exp %47 : vector<64x64xf32>
    %cst_25 = arith.constant dense<0.000000e+00> : vector<64xf32>
    %49 = vector.multi_reduction <add>, %48, %cst_25 [1] : vector<64x64xf32> to vector<64xf32>
    %50 = vector.shape_cast %49 : vector<64xf32> to vector<64x1xf32>
    %51 = tpu.reciprocal %50 {approx = true} : vector<64x1xf32> -> vector<64x1xf32>
    %52 = vector.broadcast %51 : vector<64x1xf32> to vector<64x64xf32>
    %53 = arith.mulf %48, %52 : vector<64x64xf32>
    %54 = arith.truncf %53 : vector<64x64xf32> to vector<64x64xbf16>
    %cst_26 = arith.constant dense<0.000000e+00> : vector<16x64xf32>
    %55 = tpu.matmul %42, %54, %cst_26 {dimension_numbers = #tpu.dot_dimension_numbers<[1], [1], [0], [0], [0, 0, 1, 0], [], []>} : vector<16x64xbf16>, vector<64x64xbf16>, vector<16x64xf32> -> vector<16x64xf32>
    %56 = vector.extract_strided_slice %27 {offsets = [0, 64], sizes = [16, 64], strides = [1, 1]} : vector<16x128xbf16> to vector<16x64xbf16>
    %57 = vector.extract_strided_slice %33 {offsets = [0, 64], sizes = [16, 64], strides = [1, 1]} : vector<16x128xbf16> to vector<16x64xbf16>
    %58 = vector.extract_strided_slice %39 {offsets = [0, 64], sizes = [16, 64], strides = [1, 1]} : vector<16x128xbf16> to vector<16x64xbf16>
    %cst_27 = arith.constant dense<0.000000e+00> : vector<64x64xf32>
    %59 = tpu.matmul %57, %56, %cst_27 {dimension_numbers = #tpu.dot_dimension_numbers<[0], [0], [1], [1], [0, 1, 1, 1], [], []>} : vector<16x64xbf16>, vector<16x64xbf16>, vector<64x64xf32> -> vector<64x64xf32>
    %cst_28 = arith.constant dense<0xFF800000> : vector<64xf32>
    %60 = vector.multi_reduction <maximumf>, %59, %cst_28 [1] : vector<64x64xf32> to vector<64xf32>
    %61 = vector.shape_cast %60 : vector<64xf32> to vector<64x1xf32>
    %62 = vector.broadcast %61 : vector<64x1xf32> to vector<64x64xf32>
    %63 = arith.subf %59, %62 : vector<64x64xf32>
    %64 = math.exp %63 : vector<64x64xf32>
    %cst_29 = arith.constant dense<0.000000e+00> : vector<64xf32>
    %65 = vector.multi_reduction <add>, %64, %cst_29 [1] : vector<64x64xf32> to vector<64xf32>
    %66 = vector.shape_cast %65 : vector<64xf32> to vector<64x1xf32>
    %67 = tpu.reciprocal %66 {approx = true} : vector<64x1xf32> -> vector<64x1xf32>
    %68 = vector.broadcast %67 : vector<64x1xf32> to vector<64x64xf32>
    %69 = arith.mulf %64, %68 : vector<64x64xf32>
    %70 = arith.truncf %69 : vector<64x64xf32> to vector<64x64xbf16>
    %cst_30 = arith.constant dense<0.000000e+00> : vector<16x64xf32>
    %71 = tpu.matmul %58, %70, %cst_30 {dimension_numbers = #tpu.dot_dimension_numbers<[1], [1], [0], [0], [0, 0, 1, 0], [], []>} : vector<16x64xbf16>, vector<64x64xbf16>, vector<16x64xf32> -> vector<16x64xf32>
    %72 = tpu.concatenate %55, %71 in 1 : vector<16x64xf32>, vector<16x64xf32> -> vector<16x128xf32>
    %c0_31 = arith.constant 0 : index
    %73 = memref.load %arg8[%c0_31] : memref<1xf32, #tpu.memory_space<smem>>
    %74 = vector.broadcast %73 : f32 to vector<16x128xf32>
    %75 = arith.mulf %74, %72 : vector<16x128xf32>
    %76 = arith.addf %75, %26 : vector<16x128xf32>
    %c0_32 = arith.constant 0 : index
    %c0_33 = arith.constant 0 : index
    %77 = vector.load %arg9[%c0_32, %c0_33] : memref<16x128xf32, #tpu.memory_space<vmem>>, vector<16x128xf32>
    tpu.vector_store %arg9[%c0_32, %c0_33], %76 {strides = array<i32>} : memref<16x128xf32, #tpu.memory_space<vmem>>, vector<16x128xf32>,
    return
  }
}

</mosaic_0001>

<llo_original>
// kernel: conv_block_forward.1
$region0: #{conv_block_forward.1}
  #allocation0 [shape = 'u32[]', space=smem, size = 0x4, offset = 0x4, fixed_abs, tag = 'smem constant byte address 0x4 - core index']
  #allocation1 [shape = 'u32[72,128]{1,0:T(1,128)}', space=vmem, size = 0x9000, scoped, tag = 'internal scratch']
  #allocation2 [shape = 'f32[1]{0:T(128)S(6)}', space=smem, size = 0x200, scoped, tag = 'scoped memory for conv_block_forward.1']
  %s0 = inlined_call_operand.vmem [shape: bf16[64,128], index: 0, kind: input, shape index: {}]
  %s1 = inlined_call_operand.vmem [shape: bf16[16,64], index: 1, kind: input, shape index: {}]
  %s2 = inlined_call_operand.vmem [shape: f32[16,128], index: 2, kind: input, shape index: {}]
  %s3 = inlined_call_operand.vmem [shape: f32[16,128], index: 3, kind: input, shape index: {}]
  %s4 = inlined_call_operand.vmem [shape: bf16[16,16], index: 4, kind: input, shape index: {}]
  %s5 = inlined_call_operand.vmem [shape: f32[16,1], index: 5, kind: input, shape index: {}]
  %s6 = inlined_call_operand.vmem [shape: bf16[16,16], index: 6, kind: input, shape index: {}]
  %s7 = inlined_call_operand.vmem [shape: f32[16,1], index: 7, kind: input, shape index: {}]
  %s8 = inlined_call_operand.<no memory space> [shape: f32[1], index: 8, kind: input, shape index: {}]
  %s9 = inlined_call_operand.vmem [shape: f32[16,128], index: 9, kind: output, shape index: {}]
  %s10 = sld [smem:[#allocation0]]
  $region46: #{conv_block_forward.1} parent=0
    _
  %s12 = ssub.s32 1, %s10
  %s13 = scalar_select 0, %s12, %s10
  %14 = sst [smem:[#allocation2]] %s8
  // Predicated region
  $region2: #{conv_block_forward.1} parent=0 // pred_check
    _
  $region3: #{conv_block_forward.1} parent=0 // pred_check_branch
    %16 = sbr.rel (0) target = $region5
  $region4: #{conv_block_forward.1} parent=0 // pred_region
    _
  $region5: #{conv_block_forward.1} parent=0 // pred_fallthru
    _
  // Predicated region
  $region6: #{conv_block_forward.1} parent=0 // pred_check
    _
  $region7: #{conv_block_forward.1} parent=0 // pred_check_branch
    %18 = sbr.rel (0) target = $region9
  $region8: #{conv_block_forward.1} parent=0 // pred_region
    _
  $region9: #{conv_block_forward.1} parent=0 // pred_fallthru
    _
  // Predicated region
  $region10: #{conv_block_forward.1} parent=0 // pred_check
    _
  $region11: #{conv_block_forward.1} parent=0 // pred_check_branch
    %20 = sbr.rel (0) target = $region13
  $region12: #{conv_block_forward.1} parent=0 // pred_region
    _
  $region13: #{conv_block_forward.1} parent=0 // pred_fallthru
    _
  // Predicated region
  $region14: #{conv_block_forward.1} parent=0 // pred_check
    _
  $region15: #{conv_block_forward.1} parent=0 // pred_check_branch
    %22 = sbr.rel (0) target = $region17
  $region16: #{conv_block_forward.1} parent=0 // pred_region
    _
  $region17: #{conv_block_forward.1} parent=0 // pred_fallthru
    _
  // Predicated region
  $region18: #{conv_block_forward.1} parent=0 // pred_check
    _
  $region19: #{conv_block_forward.1} parent=0 // pred_check_branch
    %24 = sbr.rel (0) target = $region21
  $region20: #{conv_block_forward.1} parent=0 // pred_region
    _
  $region21: #{conv_block_forward.1} parent=0 // pred_fallthru
    _
  // Predicated region
  $region22: #{conv_block_forward.1} parent=0 // pred_check
    _
  $region23: #{conv_block_forward.1} parent=0 // pred_check_branch
    %26 = sbr.rel (0) target = $region25
  $region24: #{conv_block_forward.1} parent=0 // pred_region
    _
  $region25: #{conv_block_forward.1} parent=0 // pred_fallthru
    _
  // Predicated region
  $region26: #{conv_block_forward.1} parent=0 // pred_check
    _
  $region27: #{conv_block_forward.1} parent=0 // pred_check_branch
    %28 = sbr.rel (0) target = $region29
  $region28: #{conv_block_forward.1} parent=0 // pred_region
    _
  $region29: #{conv_block_forward.1} parent=0 // pred_fallthru
    _
  // Predicated region
  $region30: #{conv_block_forward.1} parent=0 // pred_check
    _
  $region31: #{conv_block_forward.1} parent=0 // pred_check_branch
    %30 = sbr.rel (0) target = $region33
  $region32: #{conv_block_forward.1} parent=0 // pred_region
    _
  $region33: #{conv_block_forward.1} parent=0 // pred_fallthru
    _
  // Predicated region
  $region34: #{conv_block_forward.1} parent=0 // pred_check
    _
  $region35: #{conv_block_forward.1} parent=0 // pred_check_branch
    %32 = sbr.rel (0) target = $region37
  $region36: #{conv_block_forward.1} parent=0 // pred_region
    _
  $region37: #{conv_block_forward.1} parent=0 // pred_fallthru
    _
  %v34 = vld [vmem:[%s1] sm:$0xf]
  %v35 = vld [vmem:[%s1 + $0x4] sm:$0xf]
  %v36 = vld [vmem:[%s0] sm:$0xf]
  %v37 = vld [vmem:[%s0 + $0x4] sm:$0xf]
  %v38 = vld [vmem:[%s0 + $0x8] sm:$0xf]
  %v39 = vld [vmem:[%s0 + $0xc] sm:$0xf]
  %v40 = vld [vmem:[%s0 + $0x10] sm:$0xf]
  %v41 = vld [vmem:[%s0 + $0x14] sm:$0xf]
  %v42 = vld [vmem:[%s0 + $0x18] sm:$0xf]
  %v43 = vld [vmem:[%s0 + $0x1c] sm:$0xf]
  %v46 = vunpack.c.l.b16 %v34
  %v47 = vunpack.c.l.b16 %v35
  %v48 = vpack.c.b16 %v47, %v46
  %v57 = vunpack.c.l.b16 %v36
  %v58 = vunpack.c.l.b16 %v37
  %v59 = vunpack.c.l.b16 %v38
  %v60 = vunpack.c.l.b16 %v39
  %v61 = vunpack.c.l.b16 %v40
  %v62 = vunpack.c.l.b16 %v41
  %v63 = vunpack.c.l.b16 %v42
  %v64 = vunpack.c.l.b16 %v43
  %v65 = vpack.c.b16 %v58, %v57
  %v66 = vpack.c.b16 %v60, %v59
  %v67 = vpack.c.b16 %v62, %v61
  %v68 = vpack.c.b16 %v64, %v63
  %vm73 = vcmask 523264
  %v75 = vsel %vm73, %v48, 0
  %77 = vmatpush.bf16.msra.mxu0 0
  %78 = vmatpush.bf16.msra.mxu0 0
  %79 = vmatpush.bf16.msra.mxu0 0
  %80 = vmatpush.bf16.msra.mxu0 0
  %81 = vmatpush.bf16.msra.mxu0 %v68
  %82 = vmatpush.bf16.msra.mxu0 %v67
  %83 = vmatpush.bf16.msra.mxu0 %v66
  %84 = vmatpush.bf16.msra.mxu0 %v65
  %85 = vmatmul.bf16.gmra.mxu0 %v75
  %v86 = vpop.f32.mrf.mxu0
  %v87 = vadd.f32 0.0, %v86
  %v88 = vpop.f32.mrf.mxu0
  %v89 = vadd.f32 0.0, %v88
  %90 = vdwg.mxu0
  %91 = vadd.xlane.f32.xlu0 %v87
  %v92 = vpop.xlane.xlu0 %91
  %93 = vadd.xlane.f32.xlu0 %v89
  %v94 = vpop.xlane.xlu0 %93
  %v95 = vrcp.pop 128.0
  %v96 = vmul.f32 128.0, %v95
  %v97 = vsub.f32 1.0, %v96
  %v98 = vmul.f32 %v95, %v97
  %v99 = vadd.f32 %v95, %v98
  %vm100 = vweird.f32 %v95
  %v101 = vsel %vm100, %v95, %v99
  %v102 = vmul.f32 %v92, %v101
  %v103 = vmul.f32 %v94, %v101
  %v104 = vsub.f32 %v87, %v102
  %v105 = vsub.f32 %v89, %v103
  %v106 = vmul.f32 %v104, %v104
  %v107 = vmul.f32 %v105, %v105
  %108 = vadd.xlane.f32.xlu0 %v106
  %v109 = vpop.xlane.xlu0 %108
  %110 = vadd.xlane.f32.xlu0 %v107
  %v111 = vpop.xlane.xlu0 %110
  %v112 = vmul.f32 %v109, %v101
  %v113 = vmul.f32 %v111, %v101
  %v114 = vadd.f32 %v112, 1e-05
  %v115 = vadd.f32 %v113, 1e-05
  %v116 = vrsqrt.pop %v114
  %v117 = vmul.f32 %v116, %v114
  %v118 = vmul.f32 %v117, %v116
  %v119 = vmul.f32 0.5, %v118
  %v120 = vsub.f32 1.5, %v119
  %v121 = vmul.f32 %v116, %v120
  %vm122 = vweird.f32 %v114
  %vm123 = vweird.f32 %v116
  %vm124 = vmor %vm122, %vm123
  %v125 = vsel %vm124, %v116, %v121
  %v126 = vrsqrt.pop %v115
  %v127 = vmul.f32 %v126, %v115
  %v128 = vmul.f32 %v127, %v126
  %v129 = vmul.f32 0.5, %v128
  %v130 = vsub.f32 1.5, %v129
  %v131 = vmul.f32 %v126, %v130
  %vm132 = vweird.f32 %v115
  %vm133 = vweird.f32 %v126
  %vm134 = vmor %vm132, %vm133
  %v135 = vsel %vm134, %v126, %v131
  %v136 = vmul.f32 %v104, %v125
  %v137 = vmul.f32 %v105, %v135
  %v138 = vld [vmem:[%s2] sm:$0xff]
  %v139 = vld [vmem:[%s2 + $0x8] sm:$0xff]
  %v140 = vmul.f32 %v138, %v136
  %v141 = vmul.f32 %v139, %v137
  %v142 = vld [vmem:[%s3] sm:$0xff]
  %v143 = vld [vmem:[%s3 + $0x8] sm:$0xff]
  %v144 = vadd.f32 %v140, %v142
  %v145 = vadd.f32 %v141, %v143
  %v146 = vmax.f32 %v144, 0.0
  %v147 = vmax.f32 %v145, 0.0
  %v148 = vpack.c.bf16 %v146, %v146
  %v149 = vpack.c.bf16 %v147, %v147
  %v150 = vld [vmem:[%s4] sm:$0xf]
  %v151 = vld [vmem:[%s4 + $0x4] sm:$0xf]
  %v152 = vld [vmem:[%s5] sm:$0xff]
  %v153 = vld [vmem:[%s5 + $0x8] sm:$0xff]
  %155 = vset.pattern.permute.xlu0 0
  %156 = vperm.xlu0 %155, %v152
  %v157 = vpop.permute.xlu0 %156
  %160 = vset.pattern.permute.xlu0 0
  %161 = vperm.xlu0 %160, %v153
  %v162 = vpop.permute.xlu0 %161
  %v166 = vunpack.c.l.b16 %v150
  %v167 = vunpack.c.l.b16 %v151
  %v168 = vpack.c.b16 %v167, %v166
  %v171 = vunpack.c.l.b16 %v148
  %v172 = vunpack.c.l.b16 %v149
  %v173 = vpack.c.b16 %v172, %v171
  %vm175 = vcmask 130048
  %v177 = vsel %vm175, %v168, 0
  %179 = vmatpush.bf16.msra.mxu0 0
  %180 = vmatpush.bf16.msra.mxu0 0
  %181 = vmatpush.bf16.msra.mxu0 0
  %182 = vmatpush.bf16.msra.mxu0 0
  %183 = vmatpush.bf16.msra.mxu0 0
  %184 = vmatpush.bf16.msra.mxu0 0
  %185 = vmatpush.bf16.msra.mxu0 0
  %186 = vmatpush.bf16.msra.mxu0 %v173
  %187 = vmatmul.bf16.gmra.mxu0 %v177
  %v188 = vpop.f32.mrf.mxu0
  %v189 = vadd.f32 %v157, %v188
  %v190 = vpop.f32.mrf.mxu0
  %v191 = vadd.f32 %v162, %v190
  %192 = vdwg.mxu0
  %v193 = vpack.c.bf16 %v189, %v189
  %v194 = vpack.c.bf16 %v191, %v191
  %v195 = vld [vmem:[%s6] sm:$0xf]
  %v196 = vld [vmem:[%s6 + $0x4] sm:$0xf]
  %v197 = vld [vmem:[%s7] sm:$0xff]
  %v198 = vld [vmem:[%s7 + $0x8] sm:$0xff]
  %200 = vset.pattern.permute.xlu0 0
  %201 = vperm.xlu0 %200, %v197
  %v202 = vpop.permute.xlu0 %201
  %205 = vset.pattern.permute.xlu0 0
  %206 = vperm.xlu0 %205, %v198
  %v207 = vpop.permute.xlu0 %206
  %v211 = vunpack.c.l.b16 %v195
  %v212 = vunpack.c.l.b16 %v196
  %v213 = vpack.c.b16 %v212, %v211
  %v215 = vsel %vm175, %v213, 0
  %217 = vmatpush.bf16.msra.mxu0 0
  %218 = vmatpush.bf16.msra.mxu0 0
  %219 = vmatpush.bf16.msra.mxu0 0
  %220 = vmatpush.bf16.msra.mxu0 0
  %221 = vmatpush.bf16.msra.mxu0 0
  %222 = vmatpush.bf16.msra.mxu0 0
  %223 = vmatpush.bf16.msra.mxu0 0
  %224 = vmatpush.bf16.msra.mxu0 %v173
  %225 = vmatmul.bf16.gmra.mxu0 %v215
  %v226 = vpop.f32.mrf.mxu0
  %v227 = vadd.f32 %v202, %v226
  %v228 = vpop.f32.mrf.mxu0
  %v229 = vadd.f32 %v207, %v228
  %230 = vdwg.mxu0
  %v231 = vpack.c.bf16 %v227, %v227
  %v232 = vpack.c.bf16 %v229, %v229
  %v235 = vunpack.c.l.b16 %v193
  %v236 = vunpack.c.l.b16 %v194
  %v237 = vpack.c.b16 %v236, %v235
  %239 = vxpose.xlu0.c.b16.start [1/8] %v237, 128
  %240 = vxpose.xlu0.c.b16.cont [2/8] 0, 128
  %241 = vxpose.xlu0.c.b16.cont [3/8] 0, 128
  %242 = vxpose.xlu0.c.b16.cont [4/8] 0, 128
  %243 = vxpose.xlu0.c.b16.cont [5/8] 0, 128
  %244 = vxpose.xlu0.c.b16.cont [6/8] 0, 128
  %245 = vxpose.xlu0.c.b16.cont [7/8] 0, 128
  %246 = vxpose.xlu0.c.b16.end [8/8] 0, 128
  %v247 = vpop.trf.xlu0
  %v248 = vpop.trf.xlu0
  %v249 = vpop.trf.xlu0
  %v250 = vpop.trf.xlu0
  %v251 = vpop.trf.xlu0
  %v252 = vpop.trf.xlu0
  %v253 = vpop.trf.xlu0
  %v254 = vpop.trf.xlu0
  %v256 = vsel %vm175, %v247, 0
  %v259 = vsel %vm175, %v248, 0
  %v262 = vsel %vm175, %v249, 0
  %v265 = vsel %vm175, %v250, 0
  %267 = vmatpush.bf16.msra.mxu0 0
  %268 = vmatpush.bf16.msra.mxu0 0
  %269 = vmatpush.bf16.msra.mxu0 0
  %270 = vmatpush.bf16.msra.mxu0 0
  %271 = vmatpush.bf16.msra.mxu0 0
  %272 = vmatpush.bf16.msra.mxu0 0
  %273 = vmatpush.bf16.msra.mxu0 0
  %274 = vmatpush.bf16.msra.mxu0 %v173
  %275 = vmatmul.bf16.gmra.mxu0 %v256
  %v276 = vpop.f32.mrf.mxu0
  %v277 = vadd.f32 0.0, %v276
  %v278 = vpop.f32.mrf.mxu0
  %v279 = vadd.f32 0.0, %v278
  %280 = vmatmul.bf16.gmra.mxu0 %v259
  %v281 = vpop.f32.mrf.mxu0
  %v282 = vadd.f32 0.0, %v281
  %v283 = vpop.f32.mrf.mxu0
  %v284 = vadd.f32 0.0, %v283
  %285 = vmatmul.bf16.gmra.mxu0 %v262
  %v286 = vpop.f32.mrf.mxu0
  %v287 = vadd.f32 0.0, %v286
  %v288 = vpop.f32.mrf.mxu0
  %v289 = vadd.f32 0.0, %v288
  %290 = vmatmul.bf16.gmra.mxu0 %v265
  %v291 = vpop.f32.mrf.mxu0
  %v292 = vadd.f32 0.0, %v291
  %v293 = vpop.f32.mrf.mxu0
  %v294 = vadd.f32 0.0, %v293
  %295 = vdwg.mxu0
  %v296 = vsel %vm73, %v277, -inf
  %297 = vmax.xlane.f32.xlu0 %v296
  %v298 = vpop.xlane.xlu0 %297
  %v299 = vsel %vm73, %v279, -inf
  %300 = vmax.xlane.f32.xlu0 %v299
  %v301 = vpop.xlane.xlu0 %300
  %v302 = vsel %vm73, %v282, -inf
  %303 = vmax.xlane.f32.xlu0 %v302
  %v304 = vpop.xlane.xlu0 %303
  %v305 = vsel %vm73, %v284, -inf
  %306 = vmax.xlane.f32.xlu0 %v305
  %v307 = vpop.xlane.xlu0 %306
  %v308 = vsel %vm73, %v287, -inf
  %309 = vmax.xlane.f32.xlu0 %v308
  %v310 = vpop.xlane.xlu0 %309
  %v311 = vsel %vm73, %v289, -inf
  %312 = vmax.xlane.f32.xlu0 %v311
  %v313 = vpop.xlane.xlu0 %312
  %v314 = vsel %vm73, %v292, -inf
  %315 = vmax.xlane.f32.xlu0 %v314
  %v316 = vpop.xlane.xlu0 %315
  %v317 = vsel %vm73, %v294, -inf
  %318 = vmax.xlane.f32.xlu0 %v317
  %v319 = vpop.xlane.xlu0 %318
  %v320 = vsub.f32 %v277, %v298
  %v321 = vsub.f32 %v279, %v301
  %v322 = vsub.f32 %v282, %v304
  %v323 = vsub.f32 %v284, %v307
  %v324 = vsub.f32 %v287, %v310
  %v325 = vsub.f32 %v289, %v313
  %v326 = vsub.f32 %v292, %v316
  %v327 = vsub.f32 %v294, %v319
  %v328 = vmul.f32 %v320, 1.442695
  %v329 = vpow.pop %v328
  %v330 = vmul.f32 %v321, 1.442695
  %v331 = vpow.pop %v330
  %v332 = vmul.f32 %v322, 1.442695
  %v333 = vpow.pop %v332
  %v334 = vmul.f32 %v323, 1.442695
  %v335 = vpow.pop %v334
  %v336 = vmul.f32 %v324, 1.442695
  %v337 = vpow.pop %v336
  %v338 = vmul.f32 %v325, 1.442695
  %v339 = vpow.pop %v338
  %v340 = vmul.f32 %v326, 1.442695
  %v341 = vpow.pop %v340
  %v342 = vmul.f32 %v327, 1.442695
  %v343 = vpow.pop %v342
  %v344 = vsel %vm73, %v329, 0.0
  %345 = vadd.xlane.f32.xlu0 %v344
  %v346 = vpop.xlane.xlu0 %345
  %v347 = vsel %vm73, %v331, 0.0
  %348 = vadd.xlane.f32.xlu0 %v347
  %v349 = vpop.xlane.xlu0 %348
  %v350 = vsel %vm73, %v333, 0.0
  %351 = vadd.xlane.f32.xlu0 %v350
  %v352 = vpop.xlane.xlu0 %351
  %v353 = vsel %vm73, %v335, 0.0
  %354 = vadd.xlane.f32.xlu0 %v353
  %v355 = vpop.xlane.xlu0 %354
  %v356 = vsel %vm73, %v337, 0.0
  %357 = vadd.xlane.f32.xlu0 %v356
  %v358 = vpop.xlane.xlu0 %357
  %v359 = vsel %vm73, %v339, 0.0
  %360 = vadd.xlane.f32.xlu0 %v359
  %v361 = vpop.xlane.xlu0 %360
  %v362 = vsel %vm73, %v341, 0.0
  %363 = vadd.xlane.f32.xlu0 %v362
  %v364 = vpop.xlane.xlu0 %363
  %v365 = vsel %vm73, %v343, 0.0
  %366 = vadd.xlane.f32.xlu0 %v365
  %v367 = vpop.xlane.xlu0 %366
  %v368 = vrcp.pop %v346
  %v369 = vrcp.pop %v349
  %v370 = vrcp.pop %v352
  %v371 = vrcp.pop %v355
  %v372 = vrcp.pop %v358
  %v373 = vrcp.pop %v361
  %v374 = vrcp.pop %v364
  %v375 = vrcp.pop %v367
  %v376 = vmul.f32 %v329, %v368
  %v377 = vmul.f32 %v331, %v369
  %v378 = vmul.f32 %v333, %v370
  %v379 = vmul.f32 %v335, %v371
  %v380 = vmul.f32 %v337, %v372
  %v381 = vmul.f32 %v339, %v373
  %v382 = vmul.f32 %v341, %v374
  %v383 = vmul.f32 %v343, %v375
  %v384 = vpack.c.bf16 %v377, %v376
  %v385 = vpack.c.bf16 %v379, %v378
  %v386 = vpack.c.bf16 %v381, %v380
  %v387 = vpack.c.bf16 %v383, %v382
  %v390 = vunpack.c.l.b16 %v231
  %v391 = vunpack.c.l.b16 %v232
  %v392 = vpack.c.b16 %v391, %v390
  %v394 = vsel %vm73, %v392, 0
  %v397 = vsel %vm73, %v384, 0
  %v400 = vsel %vm73, %v385, 0
  %v403 = vsel %vm73, %v386, 0
  %v406 = vsel %vm73, %v387, 0
  %408 = vmatpush.bf16.xpose.msra.mxu0 0
  %409 = vmatpush.bf16.xpose.msra.mxu0 0
  %410 = vmatpush.bf16.xpose.msra.mxu0 0
  %411 = vmatpush.bf16.xpose.msra.mxu0 0
  %412 = vmatpush.bf16.xpose.msra.mxu0 %v406
  %413 = vmatpush.bf16.xpose.msra.mxu0 %v403
  %414 = vmatpush.bf16.xpose.msra.mxu0 %v400
  %415 = vmatpush.bf16.xpose.msra.mxu0 %v397
  %416 = vmatmul.bf16.gmra.mxu0 %v394
  %v417 = vpop.f32.mrf.mxu0
  %v418 = vadd.f32 0.0, %v417
  %v419 = vpop.f32.mrf.mxu0
  %v420 = vadd.f32 0.0, %v419
  %421 = vdwg.mxu0
  %422 = vrot.lane.b32.xlu0 %v237, 64
  %v423 = vpop.permute.xlu0 %422
  %425 = vxpose.xlu0.c.b16.start [1/8] %v423, 128
  %426 = vxpose.xlu0.c.b16.cont [2/8] 0, 128
  %427 = vxpose.xlu0.c.b16.cont [3/8] 0, 128
  %428 = vxpose.xlu0.c.b16.cont [4/8] 0, 128
  %429 = vxpose.xlu0.c.b16.cont [5/8] 0, 128
  %430 = vxpose.xlu0.c.b16.cont [6/8] 0, 128
  %431 = vxpose.xlu0.c.b16.cont [7/8] 0, 128
  %432 = vxpose.xlu0.c.b16.end [8/8] 0, 128
  %v433 = vpop.trf.xlu0
  %v434 = vpop.trf.xlu0
  %v435 = vpop.trf.xlu0
  %v436 = vpop.trf.xlu0
  %v437 = vpop.trf.xlu0
  %v438 = vpop.trf.xlu0
  %v439 = vpop.trf.xlu0
  %v440 = vpop.trf.xlu0
  %441 = vrot.lane.b32.xlu0 %v173, 64
  %v442 = vpop.permute.xlu0 %441
  %v445 = vsel %vm175, %v433, 0
  %v448 = vsel %vm175, %v434, 0
  %v451 = vsel %vm175, %v435, 0
  %v454 = vsel %vm175, %v436, 0
  %456 = vmatpush.bf16.msra.mxu0 0
  %457 = vmatpush.bf16.msra.mxu0 0
  %458 = vmatpush.bf16.msra.mxu0 0
  %459 = vmatpush.bf16.msra.mxu0 0
  %460 = vmatpush.bf16.msra.mxu0 0
  %461 = vmatpush.bf16.msra.mxu0 0
  %462 = vmatpush.bf16.msra.mxu0 0
  %463 = vmatpush.bf16.msra.mxu0 %v442
  %464 = vmatmul.bf16.gmra.mxu0 %v445
  %v465 = vpop.f32.mrf.mxu0
  %v466 = vadd.f32 0.0, %v465
  %v467 = vpop.f32.mrf.mxu0
  %v468 = vadd.f32 0.0, %v467
  %469 = vmatmul.bf16.gmra.mxu0 %v448
  %v470 = vpop.f32.mrf.mxu0
  %v471 = vadd.f32 0.0, %v470
  %v472 = vpop.f32.mrf.mxu0
  %v473 = vadd.f32 0.0, %v472
  %474 = vmatmul.bf16.gmra.mxu0 %v451
  %v475 = vpop.f32.mrf.mxu0
  %v476 = vadd.f32 0.0, %v475
  %v477 = vpop.f32.mrf.mxu0
  %v478 = vadd.f32 0.0, %v477
  %479 = vmatmul.bf16.gmra.mxu0 %v454
  %v480 = vpop.f32.mrf.mxu0
  %v481 = vadd.f32 0.0, %v480
  %v482 = vpop.f32.mrf.mxu0
  %v483 = vadd.f32 0.0, %v482
  %484 = vdwg.mxu0
  %v485 = vsel %vm73, %v466, -inf
  %486 = vmax.xlane.f32.xlu0 %v485
  %v487 = vpop.xlane.xlu0 %486
  %v488 = vsel %vm73, %v468, -inf
  %489 = vmax.xlane.f32.xlu0 %v488
  %v490 = vpop.xlane.xlu0 %489
  %v491 = vsel %vm73, %v471, -inf
  %492 = vmax.xlane.f32.xlu0 %v491
  %v493 = vpop.xlane.xlu0 %492
  %v494 = vsel %vm73, %v473, -inf
  %495 = vmax.xlane.f32.xlu0 %v494
  %v496 = vpop.xlane.xlu0 %495
  %v497 = vsel %vm73, %v476, -inf
  %498 = vmax.xlane.f32.xlu0 %v497
  %v499 = vpop.xlane.xlu0 %498
  %v500 = vsel %vm73, %v478, -inf
  %501 = vmax.xlane.f32.xlu0 %v500
  %v502 = vpop.xlane.xlu0 %501
  %v503 = vsel %vm73, %v481, -inf
  %504 = vmax.xlane.f32.xlu0 %v503
  %v505 = vpop.xlane.xlu0 %504
  %v506 = vsel %vm73, %v483, -inf
  %507 = vmax.xlane.f32.xlu0 %v506
  %v508 = vpop.xlane.xlu0 %507
  %v509 = vsub.f32 %v466, %v487
  %v510 = vsub.f32 %v468, %v490
  %v511 = vsub.f32 %v471, %v493
  %v512 = vsub.f32 %v473, %v496
  %v513 = vsub.f32 %v476, %v499
  %v514 = vsub.f32 %v478, %v502
  %v515 = vsub.f32 %v481, %v505
  %v516 = vsub.f32 %v483, %v508
  %v517 = vmul.f32 %v509, 1.442695
  %v518 = vpow.pop %v517
  %v519 = vmul.f32 %v510, 1.442695
  %v520 = vpow.pop %v519
  %v521 = vmul.f32 %v511, 1.442695
  %v522 = vpow.pop %v521
  %v523 = vmul.f32 %v512, 1.442695
  %v524 = vpow.pop %v523
  %v525 = vmul.f32 %v513, 1.442695
  %v526 = vpow.pop %v525
  %v527 = vmul.f32 %v514, 1.442695
  %v528 = vpow.pop %v527
  %v529 = vmul.f32 %v515, 1.442695
  %v530 = vpow.pop %v529
  %v531 = vmul.f32 %v516, 1.442695
  %v532 = vpow.pop %v531
  %v533 = vsel %vm73, %v518, 0.0
  %534 = vadd.xlane.f32.xlu0 %v533
  %v535 = vpop.xlane.xlu0 %534
  %v536 = vsel %vm73, %v520, 0.0
  %537 = vadd.xlane.f32.xlu0 %v536
  %v538 = vpop.xlane.xlu0 %537
  %v539 = vsel %vm73, %v522, 0.0
  %540 = vadd.xlane.f32.xlu0 %v539
  %v541 = vpop.xlane.xlu0 %540
  %v542 = vsel %vm73, %v524, 0.0
  %543 = vadd.xlane.f32.xlu0 %v542
  %v544 = vpop.xlane.xlu0 %543
  %v545 = vsel %vm73, %v526, 0.0
  %546 = vadd.xlane.f32.xlu0 %v545
  %v547 = vpop.xlane.xlu0 %546
  %v548 = vsel %vm73, %v528, 0.0
  %549 = vadd.xlane.f32.xlu0 %v548
  %v550 = vpop.xlane.xlu0 %549
  %v551 = vsel %vm73, %v530, 0.0
  %552 = vadd.xlane.f32.xlu0 %v551
  %v553 = vpop.xlane.xlu0 %552
  %v554 = vsel %vm73, %v532, 0.0
  %555 = vadd.xlane.f32.xlu0 %v554
  %v556 = vpop.xlane.xlu0 %555
  %v557 = vrcp.pop %v535
  %v558 = vrcp.pop %v538
  %v559 = vrcp.pop %v541
  %v560 = vrcp.pop %v544
  %v561 = vrcp.pop %v547
  %v562 = vrcp.pop %v550
  %v563 = vrcp.pop %v553
  %v564 = vrcp.pop %v556
  %v565 = vmul.f32 %v518, %v557
  %v566 = vmul.f32 %v520, %v558
  %v567 = vmul.f32 %v522, %v559
  %v568 = vmul.f32 %v524, %v560
  %v569 = vmul.f32 %v526, %v561
  %v570 = vmul.f32 %v528, %v562
  %v571 = vmul.f32 %v530, %v563
  %v572 = vmul.f32 %v532, %v564
  %v573 = vpack.c.bf16 %v566, %v565
  %v574 = vpack.c.bf16 %v568, %v567
  %v575 = vpack.c.bf16 %v570, %v569
  %v576 = vpack.c.bf16 %v572, %v571
  %577 = vrot.lane.b32.xlu0 %v392, 64
  %v578 = vpop.permute.xlu0 %577
  %v580 = vsel %vm73, %v578, 0
  %v583 = vsel %vm73, %v573, 0
  %v586 = vsel %vm73, %v574, 0
  %v589 = vsel %vm73, %v575, 0
  %v592 = vsel %vm73, %v576, 0
  %594 = vmatpush.bf16.xpose.msra.mxu0 0
  %595 = vmatpush.bf16.xpose.msra.mxu0 0
  %596 = vmatpush.bf16.xpose.msra.mxu0 0
  %597 = vmatpush.bf16.xpose.msra.mxu0 0
  %598 = vmatpush.bf16.xpose.msra.mxu0 %v592
  %599 = vmatpush.bf16.xpose.msra.mxu0 %v589
  %600 = vmatpush.bf16.xpose.msra.mxu0 %v586
  %601 = vmatpush.bf16.xpose.msra.mxu0 %v583
  %602 = vmatmul.bf16.gmra.mxu0 %v580
  %v603 = vpop.f32.mrf.mxu0
  %v604 = vadd.f32 0.0, %v603
  %v605 = vpop.f32.mrf.mxu0
  %v606 = vadd.f32 0.0, %v605
  %607 = vdwg.mxu0
  %610 = vrot.lane.b32.xlu0 %v604, 64
  %v611 = vpop.permute.xlu0 %610
  %612 = vrot.lane.b32.xlu0 %v606, 64
  %v613 = vpop.permute.xlu0 %612
  %v616 = vsel %vm73, %v418, %v611
  %v617 = vsel %vm73, %v420, %v613
  %s618 = sld [smem:[#allocation2]]
  %v619 = vstv %s618
  %v620 = vmul.f32 %v619, %v616
  %v621 = vmul.f32 %v619, %v617
  %v622 = vadd.f32 %v620, %v146
  %v623 = vadd.f32 %v621, %v147
  %624 = vst [vmem:[%s9] sm:$0xff] %v622
  %625 = vst [vmem:[%s9 + $0x8] sm:$0xff] %v623
  // Predicated region
  $region38: #{conv_block_forward.1} parent=0 // pred_check
    _
  $region39: #{conv_block_forward.1} parent=0 // pred_check_branch
    %627 = sbr.rel (0) target = $region41
  $region40: #{conv_block_forward.1} parent=0 // pred_region
    _
  $region41: #{conv_block_forward.1} parent=0 // pred_fallthru
    _
  // Predicated region
  $region42: #{conv_block_forward.1} parent=0 // pred_check
    _
  $region43: #{conv_block_forward.1} parent=0 // pred_check_branch
    %629 = sbr.rel (0) target = $region45
  $region44: #{conv_block_forward.1} parent=0 // pred_region
    _
  $region45: #{conv_block_forward.1} parent=0 // pred_fallthru
    _

</llo_original>
